<compile_context>
chip_gen: v7x
topology: tpu7x:2x2x1
jax: 0.10.0
libtpu: 0.0.40
codegen_flags: <defaults>
</compile_context>

<pallas_src>
import functools

import jax
import jax.numpy as jnp
from jax.experimental import pallas as pl
from jax.experimental.pallas import tpu as pltpu


def _mha_kernel(x_ref, wqkv_ref, wp_ref, bp_ref, o_ref, acc_ref, *,
                num_heads, head_size, seq_len, block_batch):
    """One grid step == (`block_batch` batch elements) x (one head).

    grid = (B // Bt, H); axis 0 parallel (batch tiles), axis 1 arbitrary (heads).

    x_ref:    (Bt*T, E)   input rows (batch*seq folded into sublanes); constant
                          over the head axis, so it is not re-DMA'd per head.
    wqkv_ref: (1, E, 3*D) this head's fused [Q|K|V] weights (Q pre-scaled by E**-0.5)
    wp_ref:   (1, D, E)   this head's slice of the output projection weight
    bp_ref:   (1, E)      projection bias
    o_ref:    (Bt*T, E)   output rows (block index constant over the head axis)
    acc_ref:  (Bt*T, E)   f32 VMEM accumulator for the head-summed projection
    """
    H, D, T, Bt = num_heads, head_size, seq_len, block_batch
    h = pl.program_id(1)

    @pl.when(h == 0)
    def _init():
        acc_ref[...] = jnp.zeros_like(acc_ref)

    # --- per-head fused QKV projection: bf16 operands, f32 accumulation ---
    xm = x_ref[...].astype(jnp.bfloat16)                      # (Bt*T, E)
    w_qkv = wqkv_ref[0].astype(jnp.bfloat16)                  # (E, 3*D)
    qkv = jnp.dot(xm, w_qkv,
                  preferred_element_type=jnp.float32).astype(jnp.bfloat16)

    q = qkv[:, 0 * D:1 * D].reshape(Bt, T, D)   # already scaled by E**-0.5
    k = qkv[:, 1 * D:2 * D].reshape(Bt, T, D)
    v = qkv[:, 2 * D:3 * D].reshape(Bt, T, D)

    # --- attention scores: contract on D, batched over Bt (no k transpose) ---
    s = jnp.einsum('btd,bsd->bts', q, k,
                   preferred_element_type=jnp.float32)        # (Bt, T, T) f32
    s = s - jnp.max(s, axis=-1, keepdims=True)
    p = jnp.exp(s)                                            # f32 exp (v5e-safe)
    p = p * pl.reciprocal(jnp.sum(p, axis=-1, keepdims=True), approx=True)
    # dropout(attention_probs): identity in eval mode.

    ctx = jnp.einsum('bts,bsd->btd', p.astype(jnp.bfloat16), v,
                     preferred_element_type=jnp.float32)      # (Bt, T, D)

    # --- per-head slice of the output projection, accumulated over heads ---
    # sum_h ctx_h @ Wp[h*D:(h+1)*D, :]  ==  concat(ctx_h) @ Wp   (no concat needed)
    w_p = wp_ref[0].astype(jnp.bfloat16)                      # (D, E)
    acc_ref[...] += jnp.dot(ctx.reshape(Bt * T, D).astype(jnp.bfloat16), w_p,
                            preferred_element_type=jnp.float32)

    @pl.when(h == H - 1)
    def _finalize():
        # dropout(proj(...)): identity in eval mode.
        o_ref[...] = (acc_ref[...] + bp_ref[...]).astype(o_ref.dtype)


def _vmem_capacity_bytes():
    try:
        return int(pltpu.get_tpu_info().vmem_capacity_bytes)
    except Exception:
        return 64 * 1024 * 1024      # conservative (v7x-sized) fallback


def _pick_block_batch(B, T, E, D, vmem_budget_bytes):
    """Largest Bt dividing B s.t. live VMEM fits, rows % 8 == 0, and (if B > 1)
    the parallel batch axis keeps >= 2 grid steps (v7x has 2 TensorCores)."""
    def live_bytes(bt):
        rows = bt * T
        io = 2 * 2 * rows * E * 4            # x + out blocks, double-buffered, f32
        acc = rows * E * 4                   # f32 accumulator scratch
        qkv = rows * 3 * D * 2               # bf16 qkv slab
        sm = bt * T * T * (4 + 2)            # f32 scores + bf16 probs
        ctx = bt * T * D * 4
        w = 2 * (E * 3 * D + D * E) * 4 + E * 4   # double-buffered per-head weights
        return io + acc + qkv + sm + ctx + w

    aligned = [c for c in range(1, B + 1)
               if B % c == 0 and ((c * T) % 8 == 0 or c == B)]
    pool = [c for c in aligned if live_bytes(c) <= vmem_budget_bytes]
    if not pool:
        pool = [min(aligned)]
    if B > 1:
        two_step = [c for c in pool if B // c >= 2]
        if two_step:
            pool = two_step
    return max(pool)


def multi_head_attention(x, wq, wk, wv, wp, bp, *, block_batch=None):
    """Multi-head self-attention matching the PyTorch module's forward (eval mode).

    x:        (B, T, E)
    wq/wk/wv: (H, E, D)   per-head Linear weights, pre-transposed (x @ w == Linear(x))
    wp:       (H*D, E)    projection weight, pre-transposed (head-major rows)
    bp:       (1, E)      projection bias
    returns   (B, T, E)
    """
    B, T, E = x.shape
    H, _, D = wq.shape
    assert wp.shape == (H * D, E) and bp.shape == (1, E)

    vmem_cap = _vmem_capacity_bytes()
    vmem_budget = min(28 * 1024 * 1024, int(vmem_cap * 0.45))
    vmem_limit = int(min(100 * 1024 * 1024, int(vmem_cap * 0.75)))

    if block_batch is None:
        block_batch = _pick_block_batch(B, T, E, D, vmem_budget)
    assert B % block_batch == 0, "block_batch must divide batch size"
    Bt = block_batch
    rows = Bt * T
    grid = (B // Bt, H)

    # Fold the (embedding_dim ** -0.5) attention scale into the Q columns; build the
    # per-head fused [Q|K|V] weight (H, E, 3*D) and per-head projection rows (H, D, E).
    scale = E ** (-0.5)
    wqkv = jnp.concatenate([wq * scale, wk, wv], axis=-1)    # (H, E, 3*D)
    wp3 = wp.reshape(H, D, E)                                # (H, D, E)

    # Fold batch*seq into the sublane dim: lane/sublane-dense 2-D blocks.
    x2 = x.reshape(B * T, E)

    kernel = functools.partial(_mha_kernel, num_heads=H, head_size=D,
                               seq_len=T, block_batch=Bt)

    flops = int(2 * B * T * E * 3 * H * D          # fused QKV (all heads)
                + 2 * B * H * T * T * D * 2        # scores + probs @ v
                + 2 * B * T * H * D * E)           # output projection
    transcendentals = int(B * H * T * T + B * H * T)
    bytes_accessed = int(4 * (x2.size + wqkv.size + wp.size + bp.size + B * T * E))

    out2 = pl.pallas_call(
        kernel,
        out_shape=jax.ShapeDtypeStruct((B * T, E), x.dtype),
        grid_spec=pltpu.PrefetchScalarGridSpec(
            num_scalar_prefetch=0,
            grid=grid,
            in_specs=[
                pl.BlockSpec((rows, E), lambda i, h: (i, 0)),       # x rows (constant over h)
                pl.BlockSpec((1, E, 3 * D), lambda i, h: (h, 0, 0)),  # this head's Wqkv
                pl.BlockSpec((1, D, E), lambda i, h: (h, 0, 0)),      # this head's Wproj rows
                pl.BlockSpec((1, E), lambda i, h: (0, 0)),            # bias
            ],
            out_specs=pl.BlockSpec((rows, E), lambda i, h: (i, 0)),   # revisited over h
            scratch_shapes=[pltpu.VMEM((rows, E), jnp.float32)],
        ),
        compiler_params=pltpu.CompilerParams(
            dimension_semantics=("parallel", "arbitrary"),
            vmem_limit_bytes=vmem_limit),
        cost_estimate=pl.CostEstimate(
            flops=flops,
            transcendentals=transcendentals,
            bytes_accessed=bytes_accessed),
    )(x2, wqkv, wp3, bp)

    return out2.reshape(B, T, E)


def _reference(x, wq, wk, wv, wp, bp):
    """Plain-JAX f32 reference mirroring the PyTorch forward (exact softmax)."""
    B, T, E = x.shape
    H, _, D = wq.shape
    heads = []
    for h in range(H):
        q = x @ wq[h]
        k = x @ wk[h]
        v = x @ wv[h]
        s = (q @ jnp.swapaxes(k, -2, -1)) * (E ** -0.5)
        p = jax.nn.softmax(s, axis=-1)
        heads.append(p @ v)
    cat = jnp.concatenate(heads, axis=-1)
    return cat @ wp + bp[0]


if __name__ == "__main__":
    # Small, module-consistent shapes.
    B, T, E = 4, 8, 32          # batch, sequence_length, embedding_dim
    H, D = 4, 8                 # num_heads, head_size

    key = jax.random.PRNGKey(0)
    kx, kq, kk, kv, kp, kb = jax.random.split(key, 6)

    x = jax.random.normal(kx, (B, T, E), dtype=jnp.float32)

    # Deterministic parameter init (nn.Linear-style uniform bounds).
    bound_in = 1.0 / (E ** 0.5)
    wq = jax.random.uniform(kq, (H, E, D), jnp.float32, -bound_in, bound_in)
    wk = jax.random.uniform(kk, (H, E, D), jnp.float32, -bound_in, bound_in)
    wv = jax.random.uniform(kv, (H, E, D), jnp.float32, -bound_in, bound_in)

    bound_proj = 1.0 / ((H * D) ** 0.5)
    wp = jax.random.uniform(kp, (H * D, E), jnp.float32, -bound_proj, bound_proj)
    bp = jax.random.uniform(kb, (1, E), jnp.float32, -bound_proj, bound_proj)

    # Heuristic picks block_batch=2 -> grid=(2, H), exercising both grid axes,
    # the per-head weight streaming, and the head accumulator.
    out = multi_head_attention(x, wq, wk, wv, wp, bp)
    out = jax.block_until_ready(out)

    ref = _reference(x, wq, wk, wv, wp, bp)
    assert out.shape == (B, T, E)
    # Tolerance accounts for bf16 MXU operands (f32 accumulation) and the
    # approximate EUP reciprocal in the softmax denominator.
    assert jnp.allclose(out, ref, atol=2e-2, rtol=2e-2), (
        "mismatch vs reference; max abs err = "
        f"{float(jnp.max(jnp.abs(out - ref)))}")

    print("KERNEL_OK")
</pallas_src>

<mosaic_0001>
module attributes {stable_mosaic.version = 11 : i64} {
  func.func @_mha_kernel(%arg0: i32, %arg1: i32, %arg2: memref<16x32xf32, #tpu.memory_space<vmem>>, %arg3: memref<1x32x24xf32, #tpu.memory_space<vmem>>, %arg4: memref<1x8x32xf32, #tpu.memory_space<vmem>>, %arg5: memref<1x32xf32, #tpu.memory_space<vmem>>, %arg6: memref<16x32xf32, #tpu.memory_space<vmem>>, %arg7: memref<16x32xf32, #tpu.memory_space<vmem>>) attributes {dimension_semantics = [#tpu.dimension_semantics<parallel>, #tpu.dimension_semantics<arbitrary>], iteration_bounds = array<i64: 2, 4>, scalar_prefetch = 0 : i64, scratch_operands = 1 : i64, tpu.core_type = #tpu.core_type<tc>, window_params = [{transform_indices = @transform_0, window_bounds = array<i64: 16, 32>}, {transform_indices = @transform_1, window_bounds = array<i64: 1, 32, 24>}, {transform_indices = @transform_2, window_bounds = array<i64: 1, 8, 32>}, {pipeline_mode = #tpu.pipeline_mode<synchronous>, transform_indices = @transform_3, window_bounds = array<i64: 1, 32>}, {transform_indices = @transform_4, window_bounds = array<i64: 16, 32>}]} {
    %c0_i32 = arith.constant 0 : i32
    %0 = arith.cmpi eq, %arg1, %c0_i32 : i32
    %1 = arith.extui %0 : i1 to i32
    %c0_i32_0 = arith.constant 0 : i32
    %2 = arith.cmpi ne, %1, %c0_i32_0 : i32
    scf.if %2 {
      %cst_18 = arith.constant 0.000000e+00 : f32
      %41 = vector.broadcast %cst_18 : f32 to vector<16x32xf32>
      %c0_19 = arith.constant 0 : index
      %c0_20 = arith.constant 0 : index
      %42 = vector.load %arg7[%c0_19, %c0_20] : memref<16x32xf32, #tpu.memory_space<vmem>>, vector<16x32xf32>
      tpu.vector_store %arg7[%c0_19, %c0_20], %41 {strides = array<i32>} : memref<16x32xf32, #tpu.memory_space<vmem>>, vector<16x32xf32>,
    } else {
    }
    %c0 = arith.constant 0 : index
    %c0_1 = arith.constant 0 : index
    %3 = vector.load %arg2[%c0, %c0_1] : memref<16x32xf32, #tpu.memory_space<vmem>>, vector<16x32xf32>
    %4 = arith.truncf %3 : vector<16x32xf32> to vector<16x32xbf16>
    %c0_2 = arith.constant 0 : index
    %c0_3 = arith.constant 0 : index
    %c0_4 = arith.constant 0 : index
    %5 = vector.load %arg3[%c0_2, %c0_3, %c0_4] : memref<1x32x24xf32, #tpu.memory_space<vmem>>, vector<1x32x24xf32>
    %6 = vector.shape_cast %5 : vector<1x32x24xf32> to vector<32x24xf32>
    %7 = arith.truncf %6 : vector<32x24xf32> to vector<32x24xbf16>
    %cst = arith.constant dense<0.000000e+00> : vector<16x24xf32>
    %8 = tpu.matmul %4, %7, %cst {dimension_numbers = #tpu.dot_dimension_numbers<[1], [0], [0], [1], [0, 0, 1, 1], [], []>} : vector<16x32xbf16>, vector<32x24xbf16>, vector<16x24xf32> -> vector<16x24xf32>
    %9 = arith.truncf %8 : vector<16x24xf32> to vector<16x24xbf16>
    %10 = vector.extract_strided_slice %9 {offsets = [0, 0], sizes = [16, 8], strides = [1, 1]} : vector<16x24xbf16> to vector<16x8xbf16>
    %11 = vector.shape_cast %10 : vector<16x8xbf16> to vector<2x8x8xbf16>
    %12 = vector.extract_strided_slice %9 {offsets = [0, 8], sizes = [16, 8], strides = [1, 1]} : vector<16x24xbf16> to vector<16x8xbf16>
    %13 = vector.shape_cast %12 : vector<16x8xbf16> to vector<2x8x8xbf16>
    %14 = vector.extract_strided_slice %9 {offsets = [0, 16], sizes = [16, 8], strides = [1, 1]} : vector<16x24xbf16> to vector<16x8xbf16>
    %15 = vector.shape_cast %14 : vector<16x8xbf16> to vector<2x8x8xbf16>
    "tpu.trace_start"() <{level = 10 : i32, message = "btd,bsd->bts"}> : () -> ()
    %cst_5 = arith.constant dense<0.000000e+00> : vector<2x8x8xf32>
    %16 = tpu.matmul %11, %13, %cst_5 {dimension_numbers = #tpu.dot_dimension_numbers<[2], [2], [1], [1], [0, 0, 0, 1, 1, 1], [0], [0]>} : vector<2x8x8xbf16>, vector<2x8x8xbf16>, vector<2x8x8xf32> -> vector<2x8x8xf32>
    "tpu.trace_stop"() : () -> ()
    %cst_6 = arith.constant dense<0xFF800000> : vector<2x8xf32>
    %17 = vector.multi_reduction <maximumf>, %16, %cst_6 [2] : vector<2x8x8xf32> to vector<2x8xf32>
    %18 = vector.shape_cast %17 : vector<2x8xf32> to vector<2x8x1xf32>
    %19 = vector.broadcast %18 : vector<2x8x1xf32> to vector<2x8x8xf32>
    %20 = arith.subf %16, %19 : vector<2x8x8xf32>
    %21 = math.exp %20 : vector<2x8x8xf32>
    %cst_7 = arith.constant dense<0.000000e+00> : vector<2x8xf32>
    %22 = vector.multi_reduction <add>, %21, %cst_7 [2] : vector<2x8x8xf32> to vector<2x8xf32>
    %23 = vector.shape_cast %22 : vector<2x8xf32> to vector<2x8x1xf32>
    %24 = tpu.reciprocal %23 {approx = true} : vector<2x8x1xf32> -> vector<2x8x1xf32>
    %25 = vector.broadcast %24 : vector<2x8x1xf32> to vector<2x8x8xf32>
    %26 = arith.mulf %21, %25 : vector<2x8x8xf32>
    %27 = arith.truncf %26 : vector<2x8x8xf32> to vector<2x8x8xbf16>
    "tpu.trace_start"() <{level = 10 : i32, message = "bts,bsd->btd"}> : () -> ()
    %cst_8 = arith.constant dense<0.000000e+00> : vector<2x8x8xf32>
    %28 = tpu.matmul %27, %15, %cst_8 {dimension_numbers = #tpu.dot_dimension_numbers<[2], [1], [1], [2], [0, 0, 0, 1, 1, 2], [0], [0]>} : vector<2x8x8xbf16>, vector<2x8x8xbf16>, vector<2x8x8xf32> -> vector<2x8x8xf32>
    "tpu.trace_stop"() : () -> ()
    %c0_9 = arith.constant 0 : index
    %c0_10 = arith.constant 0 : index
    %c0_11 = arith.constant 0 : index
    %29 = vector.load %arg4[%c0_9, %c0_10, %c0_11] : memref<1x8x32xf32, #tpu.memory_space<vmem>>, vector<1x8x32xf32>
    %30 = vector.shape_cast %29 : vector<1x8x32xf32> to vector<8x32xf32>
    %31 = arith.truncf %30 : vector<8x32xf32> to vector<8x32xbf16>
    %c0_12 = arith.constant 0 : index
    %c0_13 = arith.constant 0 : index
    %32 = vector.load %arg7[%c0_12, %c0_13] : memref<16x32xf32, #tpu.memory_space<vmem>>, vector<16x32xf32>
    %33 = vector.shape_cast %28 : vector<2x8x8xf32> to vector<16x8xf32>
    %34 = arith.truncf %33 : vector<16x8xf32> to vector<16x8xbf16>
    %cst_14 = arith.constant dense<0.000000e+00> : vector<16x32xf32>
    %35 = tpu.matmul %34, %31, %cst_14 {dimension_numbers = #tpu.dot_dimension_numbers<[1], [0], [0], [1], [0, 0, 1, 1], [], []>} : vector<16x8xbf16>, vector<8x32xbf16>, vector<16x32xf32> -> vector<16x32xf32>
    %36 = arith.addf %32, %35 : vector<16x32xf32>
    %c0_15 = arith.constant 0 : index
    %c0_16 = arith.constant 0 : index
    %37 = vector.load %arg7[%c0_15, %c0_16] : memref<16x32xf32, #tpu.memory_space<vmem>>, vector<16x32xf32>
    tpu.vector_store %arg7[%c0_15, %c0_16], %36 {strides = array<i32>} : memref<16x32xf32, #tpu.memory_space<vmem>>, vector<16x32xf32>,
    %c3_i32 = arith.constant 3 : i32
    %38 = arith.cmpi eq, %arg1, %c3_i32 : i32
    %39 = arith.extui %38 : i1 to i32
    %c0_i32_17 = arith.constant 0 : i32
    %40 = arith.cmpi ne, %39, %c0_i32_17 : i32
    scf.if %40 {
      %c0_18 = arith.constant 0 : index
      %c0_19 = arith.constant 0 : index
      %41 = vector.load %arg7[%c0_18, %c0_19] : memref<16x32xf32, #tpu.memory_space<vmem>>, vector<16x32xf32>
      %c0_20 = arith.constant 0 : index
      %c0_21 = arith.constant 0 : index
      %42 = vector.load %arg5[%c0_20, %c0_21] : memref<1x32xf32, #tpu.memory_space<vmem>>, vector<1x32xf32>
      %43 = vector.broadcast %42 : vector<1x32xf32> to vector<16x32xf32>
      %44 = arith.addf %41, %43 : vector<16x32xf32>
      %c0_22 = arith.constant 0 : index
      %c0_23 = arith.constant 0 : index
      %45 = vector.load %arg6[%c0_22, %c0_23] : memref<16x32xf32, #tpu.memory_space<vmem>>, vector<16x32xf32>
      tpu.vector_store %arg6[%c0_22, %c0_23], %44 {strides = array<i32>} : memref<16x32xf32, #tpu.memory_space<vmem>>, vector<16x32xf32>,
    } else {
    }
    return
  }
  func.func @transform_0(%arg0: i32, %arg1: i32) -> (i32, i32) {
    %c0_i32 = arith.constant 0 : i32
    %c0_i32_0 = arith.constant 0 : i32
    return %arg0, %c0_i32 : i32, i32
  }
  func.func @transform_1(%arg0: i32, %arg1: i32) -> (i32, i32, i32) {
    %c0_i32 = arith.constant 0 : i32
    %c0_i32_0 = arith.constant 0 : i32
    %c0_i32_1 = arith.constant 0 : i32
    return %arg1, %c0_i32, %c0_i32_0 : i32, i32, i32
  }
  func.func @transform_2(%arg0: i32, %arg1: i32) -> (i32, i32, i32) {
    %c0_i32 = arith.constant 0 : i32
    %c0_i32_0 = arith.constant 0 : i32
    %c0_i32_1 = arith.constant 0 : i32
    return %arg1, %c0_i32, %c0_i32_0 : i32, i32, i32
  }
  func.func @transform_3(%arg0: i32, %arg1: i32) -> (i32, i32) {
    %c0_i32 = arith.constant 0 : i32
    %c0_i32_0 = arith.constant 0 : i32
    %c0_i32_1 = arith.constant 0 : i32
    return %c0_i32, %c0_i32_0 : i32, i32
  }
  func.func @transform_4(%arg0: i32, %arg1: i32) -> (i32, i32) {
    %c0_i32 = arith.constant 0 : i32
    %c0_i32_0 = arith.constant 0 : i32
    return %arg0, %c0_i32 : i32, i32
  }
}

</mosaic_0001>

<llo_original>
// kernel: tpu_custom_call.1
$region0: #{tpu_custom_call.1}
  #allocation0 [shape = 'u32[]', space=smem, size = 0x4, offset = 0x4, fixed_abs, tag = 'smem constant byte address 0x4 - core index']
  #allocation1 [shape = 'u32[144,128]{1,0:T(1,128)}', space=vmem, size = 0x12000, scoped, tag = 'internal scratch']
  #allocation2 [shape = 'f32[16,32]{1,0:T(8,128)}', space=vmem, size = 0x2000, scoped, tag = 'scratch operand']
  %s0 = inlined_call_operand.vmem [shape: f32[32,32], index: 0, kind: input, shape index: {}]
  %s1 = inlined_call_operand.vmem [shape: f32[4,32,24], index: 1, kind: input, shape index: {}]
  %s2 = inlined_call_operand.vmem [shape: f32[4,8,32], index: 2, kind: input, shape index: {}]
  %s3 = inlined_call_operand.vmem [shape: f32[1,32], index: 3, kind: input, shape index: {}]
  %s4 = inlined_call_operand.hbm [shape: f32[32,32], index: 4, kind: output, shape index: {}]
  %s5 = sld [smem:[#allocation0]]
  $region57: #{tpu_custom_call.1} parent=0
    _
  %s7 = ssub.s32 1, %s5
  %s8 = scalar_select 0, %s7, %s5
  $region1: #{tpu_custom_call.1} parent=0
    #allocation3 [shape = 'u8[16384]{0}', space=vmem, size = 0x4000, scoped, tag = 'output window, operand 0']
    #allocation4 [shape = 's32[2]{0}', space=sflag, size = 0x8, scoped, tag = 'scoped memory for tpu_custom_call.1']
    %9 = vsyncpa [#allocation4], 0
    %s10 = scalar_lea.sflag [#allocation4], 1
    %11 = vsyncpa %s10, 0
    loop: start=0, step=1, limit=10
    $region2: #{tpu_custom_call.1} parent=1 // loop_pre_header
      _
    $region3: #{tpu_custom_call.1} parent=1 // loop_header
      %s13 = sphi 0, %s17
      %p14 = scmp.ge.s32.totalorder %s13, 10
      %s20 = sphi 0, %s32
      %s21 = sphi 0, %s28
      %s22 = sphi 0, %s20
      %s23 = sphi 0, %s21
      %s24 = sphi 0, %s22
      %s25 = sphi 0, %s23
      %s35 = sphi 0, %s37
      %s38 = sphi 0, %s35
      %s39 = sphi 0, %s38
      %s55 = sphi 0, %s39
      %s61 = sphi 0, %s63
      %s64 = sphi 0, %s61
      %s65 = sphi 0, %s64
      %s81 = sphi 0, %s65
      %s87 = sphi 0, %s89
      %s90 = sphi 0, %s87
      %s91 = sphi 0, %s90
      %s107 = sphi 0, %s91
      %s111 = sphi 0, %s111
      %s113 = sphi 0, %s111
      %s114 = sphi 0, %s113
      %s128 = sphi 0, %s114
      %s134 = sphi 0, %s136
      %s137 = sphi 0, %s134
      %s138 = sphi 0, %s137
      %s154 = sphi 0, %s138
    $region4: #{tpu_custom_call.1} parent=1 // loop_header_branch
      %16 = sbr.rel (%p14) target = $region8
    $region5: #{tpu_custom_call.1} parent=1 // loop_body
      %s18 = ssub.s32 %s13, 1
      %s19 = ssub.s32 %s13, 2
      %s26 = sadd.s32 1, %s21
      %p27 = scmp.ge.s32.totalorder %s26, 4
      %s28 = scalar_select %p27, 0, %s26
      %s29 = sadd.s32 1, %s20
      %s30 = scalar_select %p27, %s29, %s20
      %p31 = scmp.ge.s32.totalorder %s30, 2
      %s32 = scalar_select %p31, 0, %s30
      %s33 = ssub.s32 %s20, %s32
      %p34 = scmp.eq.s32.totalorder %s33, 0
      %s36 = sadd.s32 %s35, 1
      %s37 = scalar_select %p34, %s35, %s36
      %p40 = pneg %p34
      %p41 = scmp.eq.s32.totalorder %s13, 7
      %p42 = por %p40, %p41
      %p43 = scmp.ne.s32.totalorder %s35, %s38
      %p44 = scmp.eq.s32.totalorder %s13, 0
      %p45 = por %p43, %p44
      %p46 = scmp.ne.s32.totalorder %s35, %s38
      %p47 = scmp.eq.s32.totalorder %s18, 7
      %p48 = por %p46, %p47
      %p49 = scmp.ne.s32.totalorder %s38, %s39
      %p50 = scmp.eq.s32.totalorder %s18, 0
      %p51 = por %p49, %p50
      %p52 = scmp.ne.s32.totalorder %s38, %s39
      %p53 = scmp.eq.s32.totalorder %s19, 7
      %p54 = por %p52, %p53
      %p56 = scmp.ne.s32.totalorder %s39, %s55
      %p57 = scmp.eq.s32.totalorder %s19, 0
      %p58 = por %p56, %p57
      %s59 = ssub.s32 %s21, %s28
      %p60 = scmp.eq.s32.totalorder %s59, 0
      %s62 = sadd.s32 %s61, 1
      %s63 = scalar_select %p60, %s61, %s62
      %p66 = pneg %p60
      %p67 = scmp.eq.s32.totalorder %s13, 7
      %p68 = por %p66, %p67
      %p69 = scmp.ne.s32.totalorder %s61, %s64
      %p70 = scmp.eq.s32.totalorder %s13, 0
      %p71 = por %p69, %p70
      %p72 = scmp.ne.s32.totalorder %s61, %s64
      %p73 = scmp.eq.s32.totalorder %s18, 7
      %p74 = por %p72, %p73
      %p75 = scmp.ne.s32.totalorder %s64, %s65
      %p76 = scmp.eq.s32.totalorder %s18, 0
      %p77 = por %p75, %p76
      %p78 = scmp.ne.s32.totalorder %s64, %s65
      %p79 = scmp.eq.s32.totalorder %s19, 7
      %p80 = por %p78, %p79
      %p82 = scmp.ne.s32.totalorder %s65, %s81
      %p83 = scmp.eq.s32.totalorder %s19, 0
      %p84 = por %p82, %p83
      %s85 = ssub.s32 %s21, %s28
      %p86 = scmp.eq.s32.totalorder %s85, 0
      %s88 = sadd.s32 %s87, 1
      %s89 = scalar_select %p86, %s87, %s88
      %p92 = pneg %p86
      %p93 = scmp.eq.s32.totalorder %s13, 7
      %p94 = por %p92, %p93
      %p95 = scmp.ne.s32.totalorder %s87, %s90
      %p96 = scmp.eq.s32.totalorder %s13, 0
      %p97 = por %p95, %p96
      %p98 = scmp.ne.s32.totalorder %s87, %s90
      %p99 = scmp.eq.s32.totalorder %s18, 7
      %p100 = por %p98, %p99
      %p101 = scmp.ne.s32.totalorder %s90, %s91
      %p102 = scmp.eq.s32.totalorder %s18, 0
      %p103 = por %p101, %p102
      %p104 = scmp.ne.s32.totalorder %s90, %s91
      %p105 = scmp.eq.s32.totalorder %s19, 7
      %p106 = por %p104, %p105
      %p108 = scmp.ne.s32.totalorder %s91, %s107
      %p109 = scmp.eq.s32.totalorder %s19, 0
      %p110 = por %p108, %p109
      %s112 = sadd.s32 %s111, 1
      %p115 = scmp.eq.s32.totalorder %s13, 7
      %p116 = scmp.ne.s32.totalorder %s111, %s113
      %p117 = scmp.eq.s32.totalorder %s13, 0
      %p118 = por %p116, %p117
      %p119 = scmp.ne.s32.totalorder %s111, %s113
      %p120 = scmp.eq.s32.totalorder %s18, 7
      %p121 = por %p119, %p120
      %p122 = scmp.ne.s32.totalorder %s113, %s114
      %p123 = scmp.eq.s32.totalorder %s18, 0
      %p124 = por %p122, %p123
      %p125 = scmp.ne.s32.totalorder %s113, %s114
      %p126 = scmp.eq.s32.totalorder %s19, 7
      %p127 = por %p125, %p126
      %p129 = scmp.ne.s32.totalorder %s114, %s128
      %p130 = scmp.eq.s32.totalorder %s19, 0
      %p131 = por %p129, %p130
      %s132 = ssub.s32 %s20, %s32
      %p133 = scmp.eq.s32.totalorder %s132, 0
      %s135 = sadd.s32 %s134, 1
      %s136 = scalar_select %p133, %s134, %s135
      %p139 = pneg %p133
      %p140 = scmp.eq.s32.totalorder %s13, 7
      %p141 = por %p139, %p140
      %p142 = scmp.ne.s32.totalorder %s134, %s137
      %p143 = scmp.eq.s32.totalorder %s13, 0
      %p144 = por %p142, %p143
      %p145 = scmp.ne.s32.totalorder %s134, %s137
      %p146 = scmp.eq.s32.totalorder %s18, 7
      %p147 = por %p145, %p146
      %p148 = scmp.ne.s32.totalorder %s137, %s138
      %p149 = scmp.eq.s32.totalorder %s18, 0
      %p150 = por %p148, %p149
      %p151 = scmp.ne.s32.totalorder %s137, %s138
      %p152 = scmp.eq.s32.totalorder %s19, 7
      %p153 = por %p151, %p152
      %p155 = scmp.ne.s32.totalorder %s138, %s154
      %p156 = scmp.eq.s32.totalorder %s19, 0
      %p157 = por %p155, %p156
      %p158 = scmp.le.s32.totalorder 1, %s13
      %p159 = scmp.lt.s32.totalorder %s13, 9
      %p160 = pnand %p158, %p159
      %p161 = pneg %p160
      // Predicated region
      $region9: #{tpu_custom_call.1} parent=5 // pred_check
        _
      $region10: #{tpu_custom_call.1} parent=5 // pred_check_branch
        %163 = sbr.rel (%p160) target = $region12
      $region11: #{tpu_custom_call.1} parent=5 // pred_region
        %s164 = ssub.s32 %s13, 1
        // Predicated region
        $region13: #{tpu_custom_call.1} parent=11 // pred_check
          %p165 = pneg %p124
        $region14: #{tpu_custom_call.1} parent=11 // pred_check_branch
          %167 = sbr.rel (%p165) target = $region16
        $region15: #{tpu_custom_call.1} parent=11 // pred_region
          _
        $region16: #{tpu_custom_call.1} parent=11 // pred_fallthru
          _
      $region12: #{tpu_custom_call.1} parent=5 // pred_fallthru
        _
      %p168 = scmp.lt.s32.totalorder %s13, 8
      // Predicated region
      $region17: #{tpu_custom_call.1} parent=5 // pred_check
        %p169 = pneg %p168
      $region18: #{tpu_custom_call.1} parent=5 // pred_check_branch
        %171 = sbr.rel (%p169) target = $region20
      $region19: #{tpu_custom_call.1} parent=5 // pred_region
        // Predicated region
        $region21: #{tpu_custom_call.1} parent=19 // pred_check
          %p172 = pneg %p45
        $region22: #{tpu_custom_call.1} parent=19 // pred_check_branch
          %174 = sbr.rel (%p172) target = $region24
        $region23: #{tpu_custom_call.1} parent=19 // pred_region
          %s175 = smul.u32 2, %s20
          %p176 = scmp.lt.s32.totalorder %s175, 3
          %s177 = scalar_select %p176, %s175, 3
          %s178 = smul.addr %s177, 8
          %s179 = scalar_lea.vmem %s0, %s178
          %s180 = smul.u32 2, %s20
        $region24: #{tpu_custom_call.1} parent=19 // pred_fallthru
          _
        // Predicated region
        $region25: #{tpu_custom_call.1} parent=19 // pred_check
          %p181 = pneg %p71
        $region26: #{tpu_custom_call.1} parent=19 // pred_check_branch
          %183 = sbr.rel (%p181) target = $region28
        $region27: #{tpu_custom_call.1} parent=19 // pred_region
          %p184 = scmp.lt.s32.totalorder %s21, 3
          %s185 = scalar_select %p184, %s21, 3
          %s186 = smul.addr %s185, 4
          %s187 = smul.addr %s186, 8
          %s188 = scalar_lea.vmem %s1, %s187
        $region28: #{tpu_custom_call.1} parent=19 // pred_fallthru
          _
        // Predicated region
        $region29: #{tpu_custom_call.1} parent=19 // pred_check
          %p189 = pneg %p97
        $region30: #{tpu_custom_call.1} parent=19 // pred_check_branch
          %191 = sbr.rel (%p189) target = $region32
        $region31: #{tpu_custom_call.1} parent=19 // pred_region
          %p192 = scmp.lt.s32.totalorder %s21, 3
          %s193 = scalar_select %p192, %s21, 3
          %s194 = smul.addr %s193, 8
          %s195 = scalar_lea.vmem %s2, %s194
        $region32: #{tpu_custom_call.1} parent=19 // pred_fallthru
          _
      $region20: #{tpu_custom_call.1} parent=5 // pred_fallthru
        _
      %p196 = scmp.le.s32.totalorder 1, %s13
      %p197 = scmp.lt.s32.totalorder %s13, 9
      %p198 = pnand %p196, %p197
      %p199 = pneg %p198
      // Predicated region
      $region33: #{tpu_custom_call.1} parent=5 // pred_check
        _
      $region34: #{tpu_custom_call.1} parent=5 // pred_check_branch
        %201 = sbr.rel (%p198) target = $region36
      $region35: #{tpu_custom_call.1} parent=5 // pred_region
        %s202 = ssub.s32 %s13, 1
        %s203 = smul.u32 2, %s22
        %p204 = scmp.lt.s32.totalorder %s203, 3
        %s205 = scalar_select %p204, %s203, 3
        %s206 = smul.addr %s205, 8
        %s207 = scalar_lea.vmem %s0, %s206
        %p208 = pneg %p51
        %p209 = pneg %p48
        %p210 = scmp.lt.s32.totalorder %s23, 3
        %s211 = scalar_select %p210, %s23, 3
        %s212 = smul.addr %s211, 4
        %s213 = smul.addr %s212, 8
        %s214 = scalar_lea.vmem %s1, %s213
        %p215 = pneg %p77
        %p216 = pneg %p74
        %p217 = scmp.lt.s32.totalorder %s23, 3
        %s218 = scalar_select %p217, %s23, 3
        %s219 = smul.addr %s218, 8
        %s220 = scalar_lea.vmem %s2, %s219
        %p221 = pneg %p103
        %p222 = pneg %p100
        %p223 = pneg %p124
        %p224 = pneg %p121
        %p225 = pneg %p150
        %p226 = pneg %p147
        %s227 = sand.u32 %s137, 1
        %s228 = scalar_lea.sflag [#allocation4], %s227
        %s229 = sand.u32 %s137, 1
        %s230 = smul.addr %s229, 16
        %s231 = scalar_lea.vmem [#allocation3], %s230
        %s232 = smul.u32 2, %s22
        %p233 = scmp.lt.s32.totalorder %s232, 3
        %s234 = scalar_select %p233, %s232, 3
        %s235 = smul.addr %s234, 8
        %s236 = scalar_lea.vmem %s0, %s235
        %s237 = smul.u32 2, %s22
        %p238 = scmp.lt.s32.totalorder %s23, 3
        %s239 = scalar_select %p238, %s23, 3
        %s240 = smul.addr %s239, 4
        %s241 = smul.addr %s240, 8
        %s242 = scalar_lea.vmem %s1, %s241
        %p243 = scmp.lt.s32.totalorder %s23, 3
        %s244 = scalar_select %p243, %s23, 3
        %s245 = smul.addr %s244, 8
        %s246 = scalar_lea.vmem %s2, %s245
        %s247 = smul.u32 2, %s22
        %p249 = scmp.eq.s32.totalorder %s23, 0
        // Predicated region
        $region37: #{tpu_custom_call.1} parent=35 // pred_check
          %p250 = pneg %p249
        $region38: #{tpu_custom_call.1} parent=35 // pred_check_branch
          %252 = sbr.rel (%p250) target = $region40
        $region39: #{tpu_custom_call.1} parent=35 // pred_region
          %vm253 = vcmask 261120
          %254 = vst.msk [vmem:[#allocation2] sm:$0xff] %vm253, 0.0
          %255 = vst.msk [vmem:[#allocation2 + $0x8] sm:$0xff] %vm253, 0.0
        $region40: #{tpu_custom_call.1} parent=35 // pred_fallthru
          _
        %v256 = vld [vmem:[%s236] sm:$0xff]
        %v257 = vld [vmem:[%s236 + $0x8] sm:$0xff]
        %v258 = vpack.c.bf16 %v257, %v256
        %v259 = vld [vmem:[%s242] sm:$0xff]
        %v260 = vld [vmem:[%s242 + $0x8] sm:$0xff]
        %v261 = vld [vmem:[%s242 + $0x10] sm:$0xff]
        %v262 = vld [vmem:[%s242 + $0x18] sm:$0xff]
        %v263 = vpack.c.bf16 %v260, %v259
        %v264 = vpack.c.bf16 %v262, %v261
        %vm265 = vcmask 261120
        %v267 = vsel %vm265, %v258, 0
        %269 = vmatprep.subr.bf16.mxu0 0
        %270 = vmatpush1.bf16.msra.mxu0 %v263
        %271 = vmatprep.subr.bf16.mxu0 0
        %272 = vmatpush1.bf16.msra.mxu0 %v264
        %273 = vmatprep.subr.bf16.mxu0 0
        %274 = vmatpush1.bf16.msra.mxu0 0
        %275 = vmatprep.subr.bf16.mxu0 0
        %276 = vmatpush1.bf16.msra.mxu0 0
        %277 = vmatprep.subr.bf16.mxu0 0
        %278 = vmatpush1.bf16.msra.mxu0 0
        %279 = vmatprep.subr.bf16.mxu0 0
        %280 = vmatpush1.bf16.msra.mxu0 0
        %281 = vmatprep.subr.bf16.mxu0 0
        %282 = vmatpush1.bf16.msra.mxu0 0
        %283 = vmatprep.subr.bf16.mxu0 0
        %284 = vmatpush1.bf16.msra.mxu0 0
        %285 = vmatprep.subr.bf16.mxu0 0
        %286 = vmatpush1.bf16.msra.mxu0 0
        %287 = vmatprep.subr.bf16.mxu0 0
        %288 = vmatpush1.bf16.msra.mxu0 0
        %289 = vmatprep.subr.bf16.mxu0 0
        %290 = vmatpush1.bf16.msra.mxu0 0
        %291 = vmatprep.subr.bf16.mxu0 0
        %292 = vmatpush1.bf16.msra.mxu0 0
        %293 = vmatprep.subr.bf16.mxu0 0
        %294 = vmatpush1.bf16.msra.mxu0 0
        %295 = vmatprep.subr.bf16.mxu0 0
        %296 = vmatpush1.bf16.msra.mxu0 0
        %297 = vmatprep.subr.bf16.mxu0 0
        %298 = vmatpush1.bf16.msra.mxu0 0
        %299 = vmatprep.subr.bf16.mxu0 0
        %300 = vmatpush1.bf16.msra.mxu0 0
        %301 = vmatprep.mubr.bf16.mxu0 0
        %302 = vmatmul.mubr.bf16.gmra.mrb[0].mxu0 %v267
        %v303 = vpop.f32.mrb[0].mxu0
        %v304 = vadd.f32 0.0, %v303
        %v305 = vpop.f32.mrb[0].mxu0
        %v306 = vpop.f32.mrb[0].mxu0
        %v307 = vadd.f32 0.0, %v306
        %v308 = vpop.f32.mrb[0].mxu0
        %309 = vdwg.mxu0
        %v310 = vpack.c.bf16 %v307, %v304
        %v312 = vunpack.c.l.b16 %v310
        %v313 = vunpack.c.h.b16 %v310
        %v314 = vpack.c.b16 %v312, %v312
        %v315 = vpack.c.b16 %v313, %v313
        %316 = vrot.lane.b32.xlu0 %v314, 120
        %v317 = vpop.permute.xlu0 %316
        %vm318 = vcmask 64512
        %v320 = vsel %vm318, %v314, 0
        %v323 = vsel %vm318, %v317, 0
        %325 = vmatprep.subr.bf16.mxu0 0
        %326 = vmatpush1.bf16.xpose.msra.mxu0 %v323
        %327 = vmatprep.subr.bf16.mxu0 0
        %328 = vmatpush1.bf16.xpose.msra.mxu0 0
        %329 = vmatprep.subr.bf16.mxu0 0
        %330 = vmatpush1.bf16.xpose.msra.mxu0 0
        %331 = vmatprep.subr.bf16.mxu0 0
        %332 = vmatpush1.bf16.xpose.msra.mxu0 0
        %333 = vmatprep.subr.bf16.mxu0 0
        %334 = vmatpush1.bf16.xpose.msra.mxu0 0
        %335 = vmatprep.subr.bf16.mxu0 0
        %336 = vmatpush1.bf16.xpose.msra.mxu0 0
        %337 = vmatprep.subr.bf16.mxu0 0
        %338 = vmatpush1.bf16.xpose.msra.mxu0 0
        %339 = vmatprep.subr.bf16.mxu0 0
        %340 = vmatpush1.bf16.xpose.msra.mxu0 0
        %341 = vmatprep.subr.bf16.mxu0 0
        %342 = vmatpush1.bf16.xpose.msra.mxu0 0
        %343 = vmatprep.subr.bf16.mxu0 0
        %344 = vmatpush1.bf16.xpose.msra.mxu0 0
        %345 = vmatprep.subr.bf16.mxu0 0
        %346 = vmatpush1.bf16.xpose.msra.mxu0 0
        %347 = vmatprep.subr.bf16.mxu0 0
        %348 = vmatpush1.bf16.xpose.msra.mxu0 0
        %349 = vmatprep.subr.bf16.mxu0 0
        %350 = vmatpush1.bf16.xpose.msra.mxu0 0
        %351 = vmatprep.subr.bf16.mxu0 0
        %352 = vmatpush1.bf16.xpose.msra.mxu0 0
        %353 = vmatprep.subr.bf16.mxu0 0
        %354 = vmatpush1.bf16.xpose.msra.mxu0 0
        %355 = vmatprep.subr.bf16.mxu0 0
        %356 = vmatpush1.bf16.xpose.msra.mxu0 0
        %357 = vmatprep.mubr.bf16.mxu0 0
        %358 = vmatmul.mubr.bf16.gmra.mrb[0].mxu0 %v320
        %v359 = vpop.f32.mrb[0].mxu0
        %v360 = vadd.f32 0.0, %v359
        %v361 = vpop.f32.mrb[0].mxu0
        %v362 = vpop.f32.mrb[0].mxu0
        %v363 = vpop.f32.mrb[0].mxu0
        %364 = vdwg.mxu0
        %365 = vrot.lane.b32.xlu0 %v315, 120
        %v366 = vpop.permute.xlu0 %365
        %v368 = vsel %vm318, %v315, 0
        %v371 = vsel %vm318, %v366, 0
        %373 = vmatprep.subr.bf16.mxu0 0
        %374 = vmatpush1.bf16.xpose.msra.mxu0 %v371
        %375 = vmatprep.subr.bf16.mxu0 0
        %376 = vmatpush1.bf16.xpose.msra.mxu0 0
        %377 = vmatprep.subr.bf16.mxu0 0
        %378 = vmatpush1.bf16.xpose.msra.mxu0 0
        %379 = vmatprep.subr.bf16.mxu0 0
        %380 = vmatpush1.bf16.xpose.msra.mxu0 0
        %381 = vmatprep.subr.bf16.mxu0 0
        %382 = vmatpush1.bf16.xpose.msra.mxu0 0
        %383 = vmatprep.subr.bf16.mxu0 0
        %384 = vmatpush1.bf16.xpose.msra.mxu0 0
        %385 = vmatprep.subr.bf16.mxu0 0
        %386 = vmatpush1.bf16.xpose.msra.mxu0 0
        %387 = vmatprep.subr.bf16.mxu0 0
        %388 = vmatpush1.bf16.xpose.msra.mxu0 0
        %389 = vmatprep.subr.bf16.mxu0 0
        %390 = vmatpush1.bf16.xpose.msra.mxu0 0
        %391 = vmatprep.subr.bf16.mxu0 0
        %392 = vmatpush1.bf16.xpose.msra.mxu0 0
        %393 = vmatprep.subr.bf16.mxu0 0
        %394 = vmatpush1.bf16.xpose.msra.mxu0 0
        %395 = vmatprep.subr.bf16.mxu0 0
        %396 = vmatpush1.bf16.xpose.msra.mxu0 0
        %397 = vmatprep.subr.bf16.mxu0 0
        %398 = vmatpush1.bf16.xpose.msra.mxu0 0
        %399 = vmatprep.subr.bf16.mxu0 0
        %400 = vmatpush1.bf16.xpose.msra.mxu0 0
        %401 = vmatprep.subr.bf16.mxu0 0
        %402 = vmatpush1.bf16.xpose.msra.mxu0 0
        %403 = vmatprep.subr.bf16.mxu0 0
        %404 = vmatpush1.bf16.xpose.msra.mxu0 0
        %405 = vmatprep.mubr.bf16.mxu0 0
        %406 = vmatmul.mubr.bf16.gmra.mrb[0].mxu0 %v368
        %v407 = vpop.f32.mrb[0].mxu0
        %v408 = vadd.f32 0.0, %v407
        %v409 = vpop.f32.mrb[0].mxu0
        %v410 = vpop.f32.mrb[0].mxu0
        %v411 = vpop.f32.mrb[0].mxu0
        %412 = vdwg.mxu0
        %v413 = vsel %vm318, %v360, -inf
        %414 = vmax.xlane.f32.xlu0 %v413
        %v415 = vpop.xlane.xlu0 %414
        %v416 = vsel %vm318, %v408, -inf
        %417 = vmax.xlane.f32.xlu0 %v416
        %v418 = vpop.xlane.xlu0 %417
        %v419 = vsub.f32 %v360, %v415
        %v420 = vsub.f32 %v408, %v418
        %v421 = vmul.f32 %v419, 1.442695
        %v422 = vpow.pop %v421
        %v423 = vmul.f32 %v420, 1.442695
        %v424 = vpow.pop %v423
        %v425 = vsel %vm318, %v422, 0.0
        %426 = vadd.xlane.f32.xlu0 %v425
        %v427 = vpop.xlane.xlu0 %426
        %v428 = vsel %vm318, %v424, 0.0
        %429 = vadd.xlane.f32.xlu0 %v428
        %v430 = vpop.xlane.xlu0 %429
        %v431 = vrcp.pop %v427
        %v432 = vrcp.pop %v430
        %v433 = vmul.f32 %v422, %v431
        %v434 = vmul.f32 %v424, %v432
        %v435 = vpack.c.bf16 %v433, %v433
        %v436 = vpack.c.bf16 %v434, %v434
        %437 = vrot.lane.b32.xlu0 %v314, 112
        %v438 = vpop.permute.xlu0 %437
        %v440 = vsel %vm318, %v435, 0
        %vm442 = vcmask 1043456
        %v444 = vsel %vm442, %v438, 0
        %446 = vmatprep.subr.bf16.mxu0 0
        %447 = vmatpush1.bf16.msra.mxu0 %v444
        %448 = vmatprep.subr.bf16.mxu0 0
        %449 = vmatpush1.bf16.msra.mxu0 0
        %450 = vmatprep.subr.bf16.mxu0 0
        %451 = vmatpush1.bf16.msra.mxu0 0
        %452 = vmatprep.subr.bf16.mxu0 0
        %453 = vmatpush1.bf16.msra.mxu0 0
        %454 = vmatprep.subr.bf16.mxu0 0
        %455 = vmatpush1.bf16.msra.mxu0 0
        %456 = vmatprep.subr.bf16.mxu0 0
        %457 = vmatpush1.bf16.msra.mxu0 0
        %458 = vmatprep.subr.bf16.mxu0 0
        %459 = vmatpush1.bf16.msra.mxu0 0
        %460 = vmatprep.subr.bf16.mxu0 0
        %461 = vmatpush1.bf16.msra.mxu0 0
        %462 = vmatprep.subr.bf16.mxu0 0
        %463 = vmatpush1.bf16.msra.mxu0 0
        %464 = vmatprep.subr.bf16.mxu0 0
        %465 = vmatpush1.bf16.msra.mxu0 0
        %466 = vmatprep.subr.bf16.mxu0 0
        %467 = vmatpush1.bf16.msra.mxu0 0
        %468 = vmatprep.subr.bf16.mxu0 0
        %469 = vmatpush1.bf16.msra.mxu0 0
        %470 = vmatprep.subr.bf16.mxu0 0
        %471 = vmatpush1.bf16.msra.mxu0 0
        %472 = vmatprep.subr.bf16.mxu0 0
        %473 = vmatpush1.bf16.msra.mxu0 0
        %474 = vmatprep.subr.bf16.mxu0 0
        %475 = vmatpush1.bf16.msra.mxu0 0
        %476 = vmatprep.subr.bf16.mxu0 0
        %477 = vmatpush1.bf16.msra.mxu0 0
        %478 = vmatprep.mubr.bf16.mxu0 0
        %479 = vmatmul.mubr.bf16.gmra.mrb[0].mxu0 %v440
        %v480 = vpop.f32.mrb[0].mxu0
        %v481 = vadd.f32 0.0, %v480
        %v482 = vpop.f32.mrb[0].mxu0
        %v483 = vpop.f32.mrb[0].mxu0
        %v484 = vpop.f32.mrb[0].mxu0
        %485 = vdwg.mxu0
        %486 = vrot.lane.b32.xlu0 %v315, 112
        %v487 = vpop.permute.xlu0 %486
        %v489 = vsel %vm318, %v436, 0
        %v492 = vsel %vm442, %v487, 0
        %494 = vmatprep.subr.bf16.mxu0 0
        %495 = vmatpush1.bf16.msra.mxu0 %v492
        %496 = vmatprep.subr.bf16.mxu0 0
        %497 = vmatpush1.bf16.msra.mxu0 0
        %498 = vmatprep.subr.bf16.mxu0 0
        %499 = vmatpush1.bf16.msra.mxu0 0
        %500 = vmatprep.subr.bf16.mxu0 0
        %501 = vmatpush1.bf16.msra.mxu0 0
        %502 = vmatprep.subr.bf16.mxu0 0
        %503 = vmatpush1.bf16.msra.mxu0 0
        %504 = vmatprep.subr.bf16.mxu0 0
        %505 = vmatpush1.bf16.msra.mxu0 0
        %506 = vmatprep.subr.bf16.mxu0 0
        %507 = vmatpush1.bf16.msra.mxu0 0
        %508 = vmatprep.subr.bf16.mxu0 0
        %509 = vmatpush1.bf16.msra.mxu0 0
        %510 = vmatprep.subr.bf16.mxu0 0
        %511 = vmatpush1.bf16.msra.mxu0 0
        %512 = vmatprep.subr.bf16.mxu0 0
        %513 = vmatpush1.bf16.msra.mxu0 0
        %514 = vmatprep.subr.bf16.mxu0 0
        %515 = vmatpush1.bf16.msra.mxu0 0
        %516 = vmatprep.subr.bf16.mxu0 0
        %517 = vmatpush1.bf16.msra.mxu0 0
        %518 = vmatprep.subr.bf16.mxu0 0
        %519 = vmatpush1.bf16.msra.mxu0 0
        %520 = vmatprep.subr.bf16.mxu0 0
        %521 = vmatpush1.bf16.msra.mxu0 0
        %522 = vmatprep.subr.bf16.mxu0 0
        %523 = vmatpush1.bf16.msra.mxu0 0
        %524 = vmatprep.subr.bf16.mxu0 0
        %525 = vmatpush1.bf16.msra.mxu0 0
        %526 = vmatprep.mubr.bf16.mxu0 0
        %527 = vmatmul.mubr.bf16.gmra.mrb[0].mxu0 %v489
        %v528 = vpop.f32.mrb[0].mxu0
        %v529 = vadd.f32 0.0, %v528
        %v530 = vpop.f32.mrb[0].mxu0
        %v531 = vpop.f32.mrb[0].mxu0
        %v532 = vpop.f32.mrb[0].mxu0
        %533 = vdwg.mxu0
        %v534 = vld [vmem:[%s246] sm:$0xff]
        %v535 = vpack.c.bf16 %v534, %v534
        %v536 = vld [vmem:[#allocation2] sm:$0xff]
        %v537 = vld [vmem:[#allocation2 + $0x8] sm:$0xff]
        %v538 = vpack.c.bf16 %v529, %v481
        %v540 = vsel %vm318, %v538, 0
        %v543 = vsel %vm442, %v535, 0
        %545 = vmatprep.subr.bf16.mxu0 0
        %546 = vmatpush1.bf16.msra.mxu0 %v543
        %547 = vmatprep.subr.bf16.mxu0 0
        %548 = vmatpush1.bf16.msra.mxu0 0
        %549 = vmatprep.subr.bf16.mxu0 0
        %550 = vmatpush1.bf16.msra.mxu0 0
        %551 = vmatprep.subr.bf16.mxu0 0
        %552 = vmatpush1.bf16.msra.mxu0 0
        %553 = vmatprep.subr.bf16.mxu0 0
        %554 = vmatpush1.bf16.msra.mxu0 0
        %555 = vmatprep.subr.bf16.mxu0 0
        %556 = vmatpush1.bf16.msra.mxu0 0
        %557 = vmatprep.subr.bf16.mxu0 0
        %558 = vmatpush1.bf16.msra.mxu0 0
        %559 = vmatprep.subr.bf16.mxu0 0
        %560 = vmatpush1.bf16.msra.mxu0 0
        %561 = vmatprep.subr.bf16.mxu0 0
        %562 = vmatpush1.bf16.msra.mxu0 0
        %563 = vmatprep.subr.bf16.mxu0 0
        %564 = vmatpush1.bf16.msra.mxu0 0
        %565 = vmatprep.subr.bf16.mxu0 0
        %566 = vmatpush1.bf16.msra.mxu0 0
        %567 = vmatprep.subr.bf16.mxu0 0
        %568 = vmatpush1.bf16.msra.mxu0 0
        %569 = vmatprep.subr.bf16.mxu0 0
        %570 = vmatpush1.bf16.msra.mxu0 0
        %571 = vmatprep.subr.bf16.mxu0 0
        %572 = vmatpush1.bf16.msra.mxu0 0
        %573 = vmatprep.subr.bf16.mxu0 0
        %574 = vmatpush1.bf16.msra.mxu0 0
        %575 = vmatprep.subr.bf16.mxu0 0
        %576 = vmatpush1.bf16.msra.mxu0 0
        %577 = vmatprep.mubr.bf16.mxu0 0
        %578 = vmatmul.mubr.bf16.gmra.mrb[0].mxu0 %v540
        %v579 = vpop.f32.mrb[0].mxu0
        %v580 = vadd.f32 0.0, %v579
        %v581 = vpop.f32.mrb[0].mxu0
        %v582 = vpop.f32.mrb[0].mxu0
        %v583 = vadd.f32 0.0, %v582
        %v584 = vpop.f32.mrb[0].mxu0
        %585 = vdwg.mxu0
        %v586 = vadd.f32 %v536, %v580
        %v587 = vadd.f32 %v537, %v583
        %588 = vst.msk [vmem:[#allocation2] sm:$0xff] %vm265, %v586
        %589 = vst.msk [vmem:[#allocation2 + $0x8] sm:$0xff] %vm265, %v587
        %p590 = scmp.eq.s32.totalorder %s23, 3
        // Predicated region
        $region41: #{tpu_custom_call.1} parent=35 // pred_check
          %p591 = pneg %p590
        $region42: #{tpu_custom_call.1} parent=35 // pred_check_branch
          %593 = sbr.rel (%p591) target = $region44
        $region43: #{tpu_custom_call.1} parent=35 // pred_region
          %v594 = vld [vmem:[#allocation2] sm:$0xff]
          %v595 = vld [vmem:[#allocation2 + $0x8] sm:$0xff]
          %v596 = vld [vmem:[%s3] sm:$0x1]
          %v598 = vlaneseq
          %v599 = vshrl.u32 %v598, 7
          %v600 = vsub.s32 0, %v599
          %v601 = vrot.slane %v596, %v600
          %v603 = vadd.f32 %v594, %v601
          %v604 = vadd.f32 %v595, %v601
          %605 = vst.msk [vmem:[%s231] sm:$0xff] %vm265, %v603
          %606 = vst.msk [vmem:[%s231 + $0x8] sm:$0xff] %vm265, %v604
        $region44: #{tpu_custom_call.1} parent=35 // pred_fallthru
          _
        %s607 = sand.u32 %s137, 1
        %s608 = scalar_lea.sflag [#allocation4], %s607
        %s609 = sand.u32 %s137, 1
        %s610 = smul.addr %s609, 16
        %s611 = scalar_lea.vmem [#allocation3], %s610
        // Predicated region
        $region45: #{tpu_custom_call.1} parent=35 // pred_check
          %p612 = pneg %p147
        $region46: #{tpu_custom_call.1} parent=35 // pred_check_branch
          %614 = sbr.rel (%p612) target = $region48
        $region47: #{tpu_custom_call.1} parent=35 // pred_region
          %s615 = smul.u32 2, %s22
          %s617 = ssub.s32 256, 256
          %618 = vsyncadd %s608, %s617
          %s619 = smul.addr %s615, 128
          %s620 = scalar_lea.hbm %s4, %s619
          %s621 = sshll.u32 %s611, 4
          %s622 = int_to_ptr.vmem [resolvable:$true] %s621
          %627 = dma.vmem_to_hbm [thread:$0]  %s622, 256, %s620, %s608, 128, 128, 8
        $region48: #{tpu_custom_call.1} parent=35 // pred_fallthru
          _
      $region36: #{tpu_custom_call.1} parent=5 // pred_fallthru
        _
      %p628 = scmp.le.s32.totalorder 2, %s13
      // Predicated region
      $region49: #{tpu_custom_call.1} parent=5 // pred_check
        %p629 = pneg %p628
      $region50: #{tpu_custom_call.1} parent=5 // pred_check_branch
        %631 = sbr.rel (%p629) target = $region52
      $region51: #{tpu_custom_call.1} parent=5 // pred_region
        %s632 = ssub.s32 %s13, 2
        // Predicated region
        $region53: #{tpu_custom_call.1} parent=51 // pred_check
          %p633 = pneg %p153
        $region54: #{tpu_custom_call.1} parent=51 // pred_check_branch
          %635 = sbr.rel (%p633) target = $region56
        $region55: #{tpu_custom_call.1} parent=51 // pred_region
          %s636 = sand.u32 %s138, 1
          %s637 = scalar_lea.sflag [#allocation4], %s636
          %s638 = sand.u32 %s138, 1
          %s639 = smul.addr %s638, 16
          %s640 = scalar_lea.vmem [#allocation3], %s639
          %641 = dma.done %s637, 256
        $region56: #{tpu_custom_call.1} parent=51 // pred_fallthru
          _
      $region52: #{tpu_custom_call.1} parent=5 // pred_fallthru
        _
    $region6: #{tpu_custom_call.1} parent=1 // loop_footer
      %s17 = sadd.s32 1, %s13
    $region7: #{tpu_custom_call.1} parent=1 // loop_footer_branch
      %12 = sbr.rel target = $region3
    $region8: #{tpu_custom_call.1} parent=1 // loop_exit
      _
    %642 = vsyncpa [#allocation4], 1
    %s643 = scalar_lea.sflag [#allocation4], 1
    %644 = vsyncpa %s643, 1

</llo_original>
